<compile_context>
chip_gen: v6e
topology: v6e:2x2x1
jax: 0.10.0
libtpu: 0.0.40
codegen_flags: <defaults>
</compile_context>

<pallas_src>
import functools
import math

import jax
import jax.numpy as jnp
from jax import lax
from jax.experimental import pallas as pl
from jax.experimental.pallas import tpu as pltpu

_LANES = 128
_SUBLANES = 8


def _adanorm_kernel(x_ref, g_ref, b_ref, o_ref, *, pack, eps):
    # x_ref/o_ref: (TN, W) in the input dtype, W = pack * D (lane-dense when
    # pack > 1); g_ref/b_ref: (1, W) f32 with the scalar `scale` pre-folded in.
    x = x_ref[...].astype(jnp.float32)                       # f32 math in-kernel
    w = x.shape[-1]
    d = w // pack
    segs = []
    for p in range(pack):                                    # static unroll, pack small
        xs = x if pack == 1 else x[:, p * d:(p + 1) * d]     # (TN, D) lane slice
        mean = jnp.mean(xs, axis=-1, keepdims=True)          # XLU lane reduce
        xc = xs - mean
        var = jnp.mean(xc * xc, axis=-1, keepdims=True)      # biased var (torch LN)
        segs.append(xc * lax.rsqrt(var + eps))               # EUP rsqrt
    y = segs[0] if pack == 1 else jnp.concatenate(segs, axis=-1)  # (TN, W)
    # Dense 128-lane store in the native output dtype (scale already in g/b).
    o_ref[...] = (y * g_ref[...] + b_ref[...]).astype(o_ref.dtype)


def _pick_row_tile(n_rows, row_bytes, target_bytes):
    # Aim for ~target_bytes per input block; multiple of 8 sublanes unless the
    # whole row axis fits in one block (full-dim blocks are always legal).
    t = max(_SUBLANES, target_bytes // max(row_bytes, 1))
    if t >= n_rows:
        return n_rows
    return max(_SUBLANES, (t // _SUBLANES) * _SUBLANES)


def adanorm_forward(x, gamma, beta, scale, *, eps=1e-5, target_block_bytes=2 << 20):
    """Pallas TPU implementation of AdaNorm.forward: scale * LayerNorm(x)."""
    orig_shape = x.shape
    D = orig_shape[-1]
    N = math.prod(orig_shape[:-1])

    # Fold the scalar `scale` into the affine params (f32 math inside kernel).
    s = jnp.asarray(scale, dtype=jnp.float32)
    g = (s * gamma.astype(jnp.float32)).reshape(1, D)
    b = (s * beta.astype(jnp.float32)).reshape(1, D)

    # Lane-dense packing: fold `pack` logical rows into each 128-lane row when
    # D is a small divisor of 128 (free contiguous reshape in the wrapper).
    pack = _LANES // D if (D < _LANES and _LANES % D == 0) else 1
    if pack > 1 and N % pack != 0:
        pack = 1                                   # ragged: one logical row per row
    rows, width = N // pack, pack * D

    xk = x.reshape(rows, width)                    # native dtype; no upcast, no pad
    gk = g if pack == 1 else jnp.tile(g, (1, pack))
    bk = b if pack == 1 else jnp.tile(b, (1, pack))

    tn = _pick_row_tile(rows, width * xk.dtype.itemsize, target_block_bytes)
    grid = (pl.cdiv(rows, tn),)                    # final partial block is write-masked

    # VMEM budget: double-buffered x + out blocks + resident gamma/beta, with
    # headroom; capped at 48 MiB (fits v7x 64 MiB/TC, raises v5e/v6e defaults).
    block_bytes = tn * width * 2 * xk.dtype.itemsize
    resident_bytes = 2 * width * 4
    vmem_limit = int(min(max(3 * block_bytes + 4 * resident_bytes, 16 << 20), 48 << 20))

    out = pl.pallas_call(
        functools.partial(_adanorm_kernel, pack=pack, eps=float(eps)),
        out_shape=jax.ShapeDtypeStruct((rows, width), x.dtype),   # native dtype out
        grid_spec=pltpu.PrefetchScalarGridSpec(
            num_scalar_prefetch=0,
            grid=grid,
            in_specs=[
                pl.BlockSpec((tn, width), lambda i: (i, 0)),      # x row slab
                pl.BlockSpec((1, width), lambda i: (0, 0)),       # scale*gamma (resident)
                pl.BlockSpec((1, width), lambda i: (0, 0)),       # scale*beta  (resident)
            ],
            out_specs=pl.BlockSpec((tn, width), lambda i: (i, 0)),
        ),
        compiler_params=pltpu.CompilerParams(
            dimension_semantics=("parallel",),     # row blocks shard across TCs on v7x
            vmem_limit_bytes=vmem_limit,
        ),
        # TODO(synk): on v7x, sweep pipeline_mode=pl.Buffered(3) on the x/out specs.
    )(xk, gk, bk)

    return out.reshape(orig_shape)


def _reference(x, gamma, beta, scale, eps):
    xf = x.astype(jnp.float32)
    mean = jnp.mean(xf, axis=-1, keepdims=True)
    var = jnp.mean((xf - mean) ** 2, axis=-1, keepdims=True)
    y = (xf - mean) / jnp.sqrt(var + eps) * gamma.astype(jnp.float32) + beta.astype(jnp.float32)
    return jnp.float32(scale) * y


if __name__ == "__main__":
    key = jax.random.PRNGKey(0)
    kx, kg, kb = jax.random.split(key, 3)

    B, S, D = 2, 8, 32                              # batch=2, seq=8, hidden=32
    eps = 1e-5
    x = jax.random.normal(kx, (B, S, D), dtype=jnp.float32)
    # Module default init is gamma=1, beta=0, scale=1; use non-trivial (but
    # deterministic) values so the full affine + scale path is exercised.
    gamma = 1.0 + 0.1 * jax.random.normal(kg, (D,), dtype=jnp.float32)
    beta = 0.1 * jax.random.normal(kb, (D,), dtype=jnp.float32)
    scale = jnp.float32(1.25)

    # f32 path (exact torch-matching math).
    out = jax.block_until_ready(adanorm_forward(x, gamma, beta, scale, eps=eps))
    ref = _reference(x, gamma, beta, scale, eps)
    assert out.shape == ref.shape and out.dtype == jnp.float32
    assert jnp.allclose(out, ref, atol=1e-4, rtol=1e-4), float(jnp.max(jnp.abs(out - ref)))

    # bf16 path: native-dtype I/O (output stays bf16; f32 math inside kernel).
    x_bf16 = x.astype(jnp.bfloat16)
    out_bf16 = jax.block_until_ready(adanorm_forward(x_bf16, gamma, beta, scale, eps=eps))
    ref_bf16 = _reference(x_bf16, gamma, beta, scale, eps)
    assert out_bf16.dtype == jnp.bfloat16
    assert jnp.allclose(out_bf16.astype(jnp.float32), ref_bf16, atol=5e-2, rtol=5e-2)

    print("KERNEL_OK")
</pallas_src>

<mosaic_0001>
module attributes {stable_mosaic.version = 11 : i64} {
  func.func @_adanorm_kernel(%arg0: i32, %arg1: memref<4x128xf32, #tpu.memory_space<vmem>>, %arg2: memref<1x128xf32, #tpu.memory_space<vmem>>, %arg3: memref<1x128xf32, #tpu.memory_space<vmem>>, %arg4: memref<4x128xf32, #tpu.memory_space<vmem>>) attributes {dimension_semantics = [#tpu.dimension_semantics<parallel>], iteration_bounds = array<i64: 1>, scalar_prefetch = 0 : i64, scratch_operands = 0 : i64, tpu.core_type = #tpu.core_type<tc>, window_params = [{transform_indices = @transform_0, window_bounds = array<i64: 4, 128>}, {pipeline_mode = #tpu.pipeline_mode<synchronous>, transform_indices = @transform_1, window_bounds = array<i64: 1, 128>}, {pipeline_mode = #tpu.pipeline_mode<synchronous>, transform_indices = @transform_2, window_bounds = array<i64: 1, 128>}, {transform_indices = @transform_3, window_bounds = array<i64: 4, 128>}]} {
    %c0 = arith.constant 0 : index
    %c0_0 = arith.constant 0 : index
    %0 = vector.load %arg1[%c0, %c0_0] : memref<4x128xf32, #tpu.memory_space<vmem>>, vector<4x128xf32>
    %1 = vector.extract_strided_slice %0 {offsets = [0, 0], sizes = [4, 32], strides = [1, 1]} : vector<4x128xf32> to vector<4x32xf32>
    %cst = arith.constant dense<0.000000e+00> : vector<4xf32>
    %2 = vector.multi_reduction <add>, %1, %cst [1] : vector<4x32xf32> to vector<4xf32>
    %3 = vector.shape_cast %2 : vector<4xf32> to vector<4x1xf32>
    %cst_1 = arith.constant 3.200000e+01 : f32
    %4 = vector.broadcast %cst_1 : f32 to vector<4x1xf32>
    %5 = arith.divf %3, %4 : vector<4x1xf32>
    %6 = vector.broadcast %5 : vector<4x1xf32> to vector<4x32xf32>
    %7 = arith.subf %1, %6 : vector<4x32xf32>
    %8 = arith.mulf %7, %7 : vector<4x32xf32>
    %cst_2 = arith.constant dense<0.000000e+00> : vector<4xf32>
    %9 = vector.multi_reduction <add>, %8, %cst_2 [1] : vector<4x32xf32> to vector<4xf32>
    %10 = vector.shape_cast %9 : vector<4xf32> to vector<4x1xf32>
    %cst_3 = arith.constant 3.200000e+01 : f32
    %11 = vector.broadcast %cst_3 : f32 to vector<4x1xf32>
    %12 = arith.divf %10, %11 : vector<4x1xf32>
    %cst_4 = arith.constant 9.99999974E-6 : f32
    %13 = vector.broadcast %cst_4 : f32 to vector<4x1xf32>
    %14 = arith.addf %12, %13 : vector<4x1xf32>
    %15 = math.rsqrt %14 : vector<4x1xf32>
    %16 = vector.broadcast %15 : vector<4x1xf32> to vector<4x32xf32>
    %17 = arith.mulf %7, %16 : vector<4x32xf32>
    %18 = vector.extract_strided_slice %0 {offsets = [0, 32], sizes = [4, 32], strides = [1, 1]} : vector<4x128xf32> to vector<4x32xf32>
    %cst_5 = arith.constant dense<0.000000e+00> : vector<4xf32>
    %19 = vector.multi_reduction <add>, %18, %cst_5 [1] : vector<4x32xf32> to vector<4xf32>
    %20 = vector.shape_cast %19 : vector<4xf32> to vector<4x1xf32>
    %cst_6 = arith.constant 3.200000e+01 : f32
    %21 = vector.broadcast %cst_6 : f32 to vector<4x1xf32>
    %22 = arith.divf %20, %21 : vector<4x1xf32>
    %23 = vector.broadcast %22 : vector<4x1xf32> to vector<4x32xf32>
    %24 = arith.subf %18, %23 : vector<4x32xf32>
    %25 = arith.mulf %24, %24 : vector<4x32xf32>
    %cst_7 = arith.constant dense<0.000000e+00> : vector<4xf32>
    %26 = vector.multi_reduction <add>, %25, %cst_7 [1] : vector<4x32xf32> to vector<4xf32>
    %27 = vector.shape_cast %26 : vector<4xf32> to vector<4x1xf32>
    %cst_8 = arith.constant 3.200000e+01 : f32
    %28 = vector.broadcast %cst_8 : f32 to vector<4x1xf32>
    %29 = arith.divf %27, %28 : vector<4x1xf32>
    %cst_9 = arith.constant 9.99999974E-6 : f32
    %30 = vector.broadcast %cst_9 : f32 to vector<4x1xf32>
    %31 = arith.addf %29, %30 : vector<4x1xf32>
    %32 = math.rsqrt %31 : vector<4x1xf32>
    %33 = vector.broadcast %32 : vector<4x1xf32> to vector<4x32xf32>
    %34 = arith.mulf %24, %33 : vector<4x32xf32>
    %35 = vector.extract_strided_slice %0 {offsets = [0, 64], sizes = [4, 32], strides = [1, 1]} : vector<4x128xf32> to vector<4x32xf32>
    %cst_10 = arith.constant dense<0.000000e+00> : vector<4xf32>
    %36 = vector.multi_reduction <add>, %35, %cst_10 [1] : vector<4x32xf32> to vector<4xf32>
    %37 = vector.shape_cast %36 : vector<4xf32> to vector<4x1xf32>
    %cst_11 = arith.constant 3.200000e+01 : f32
    %38 = vector.broadcast %cst_11 : f32 to vector<4x1xf32>
    %39 = arith.divf %37, %38 : vector<4x1xf32>
    %40 = vector.broadcast %39 : vector<4x1xf32> to vector<4x32xf32>
    %41 = arith.subf %35, %40 : vector<4x32xf32>
    %42 = arith.mulf %41, %41 : vector<4x32xf32>
    %cst_12 = arith.constant dense<0.000000e+00> : vector<4xf32>
    %43 = vector.multi_reduction <add>, %42, %cst_12 [1] : vector<4x32xf32> to vector<4xf32>
    %44 = vector.shape_cast %43 : vector<4xf32> to vector<4x1xf32>
    %cst_13 = arith.constant 3.200000e+01 : f32
    %45 = vector.broadcast %cst_13 : f32 to vector<4x1xf32>
    %46 = arith.divf %44, %45 : vector<4x1xf32>
    %cst_14 = arith.constant 9.99999974E-6 : f32
    %47 = vector.broadcast %cst_14 : f32 to vector<4x1xf32>
    %48 = arith.addf %46, %47 : vector<4x1xf32>
    %49 = math.rsqrt %48 : vector<4x1xf32>
    %50 = vector.broadcast %49 : vector<4x1xf32> to vector<4x32xf32>
    %51 = arith.mulf %41, %50 : vector<4x32xf32>
    %52 = vector.extract_strided_slice %0 {offsets = [0, 96], sizes = [4, 32], strides = [1, 1]} : vector<4x128xf32> to vector<4x32xf32>
    %cst_15 = arith.constant dense<0.000000e+00> : vector<4xf32>
    %53 = vector.multi_reduction <add>, %52, %cst_15 [1] : vector<4x32xf32> to vector<4xf32>
    %54 = vector.shape_cast %53 : vector<4xf32> to vector<4x1xf32>
    %cst_16 = arith.constant 3.200000e+01 : f32
    %55 = vector.broadcast %cst_16 : f32 to vector<4x1xf32>
    %56 = arith.divf %54, %55 : vector<4x1xf32>
    %57 = vector.broadcast %56 : vector<4x1xf32> to vector<4x32xf32>
    %58 = arith.subf %52, %57 : vector<4x32xf32>
    %59 = arith.mulf %58, %58 : vector<4x32xf32>
    %cst_17 = arith.constant dense<0.000000e+00> : vector<4xf32>
    %60 = vector.multi_reduction <add>, %59, %cst_17 [1] : vector<4x32xf32> to vector<4xf32>
    %61 = vector.shape_cast %60 : vector<4xf32> to vector<4x1xf32>
    %cst_18 = arith.constant 3.200000e+01 : f32
    %62 = vector.broadcast %cst_18 : f32 to vector<4x1xf32>
    %63 = arith.divf %61, %62 : vector<4x1xf32>
    %cst_19 = arith.constant 9.99999974E-6 : f32
    %64 = vector.broadcast %cst_19 : f32 to vector<4x1xf32>
    %65 = arith.addf %63, %64 : vector<4x1xf32>
    %66 = math.rsqrt %65 : vector<4x1xf32>
    %67 = vector.broadcast %66 : vector<4x1xf32> to vector<4x32xf32>
    %68 = arith.mulf %58, %67 : vector<4x32xf32>
    %69 = tpu.concatenate %17, %34, %51, %68 in 1 : vector<4x32xf32>, vector<4x32xf32>, vector<4x32xf32>, vector<4x32xf32> -> vector<4x128xf32>
    %c0_20 = arith.constant 0 : index
    %c0_21 = arith.constant 0 : index
    %70 = vector.load %arg2[%c0_20, %c0_21] : memref<1x128xf32, #tpu.memory_space<vmem>>, vector<1x128xf32>
    %71 = vector.broadcast %70 : vector<1x128xf32> to vector<4x128xf32>
    %72 = arith.mulf %69, %71 : vector<4x128xf32>
    %c0_22 = arith.constant 0 : index
    %c0_23 = arith.constant 0 : index
    %73 = vector.load %arg3[%c0_22, %c0_23] : memref<1x128xf32, #tpu.memory_space<vmem>>, vector<1x128xf32>
    %74 = vector.broadcast %73 : vector<1x128xf32> to vector<4x128xf32>
    %75 = arith.addf %72, %74 : vector<4x128xf32>
    %c0_24 = arith.constant 0 : index
    %c0_25 = arith.constant 0 : index
    %76 = vector.load %arg4[%c0_24, %c0_25] : memref<4x128xf32, #tpu.memory_space<vmem>>, vector<4x128xf32>
    tpu.vector_store %arg4[%c0_24, %c0_25], %75 {strides = array<i32>} : memref<4x128xf32, #tpu.memory_space<vmem>>, vector<4x128xf32>,
    return
  }
  func.func @transform_0(%arg0: i32) -> (i32, i32) {
    %c0_i32 = arith.constant 0 : i32
    %c0_i32_0 = arith.constant 0 : i32
    return %arg0, %c0_i32 : i32, i32
  }
  func.func @transform_1(%arg0: i32) -> (i32, i32) {
    %c0_i32 = arith.constant 0 : i32
    %c0_i32_0 = arith.constant 0 : i32
    %c0_i32_1 = arith.constant 0 : i32
    return %c0_i32, %c0_i32_0 : i32, i32
  }
  func.func @transform_2(%arg0: i32) -> (i32, i32) {
    %c0_i32 = arith.constant 0 : i32
    %c0_i32_0 = arith.constant 0 : i32
    %c0_i32_1 = arith.constant 0 : i32
    return %c0_i32, %c0_i32_0 : i32, i32
  }
  func.func @transform_3(%arg0: i32) -> (i32, i32) {
    %c0_i32 = arith.constant 0 : i32
    %c0_i32_0 = arith.constant 0 : i32
    return %arg0, %c0_i32 : i32, i32
  }
}

</mosaic_0001>

<llo_original>
// kernel: tpu_custom_call.1
$region0: #{tpu_custom_call.1}
  #allocation0 [shape = 'u32[]', space=smem, size = 0x4, offset = 0x4, fixed_abs, tag = 'smem constant byte address 0x4 - core index']
  #allocation1 [shape = 'u32[144,128]{1,0:T(1,128)}', space=vmem, size = 0x12000, scoped, tag = 'internal scratch']
  %s0 = inlined_call_operand.hbm [shape: f32[4,128], index: 0, kind: input, shape index: {}]
  %s1 = inlined_call_operand.vmem [shape: f32[1,128], index: 1, kind: input, shape index: {}]
  %s2 = inlined_call_operand.vmem [shape: f32[1,128], index: 2, kind: input, shape index: {}]
  %s3 = inlined_call_operand.hbm [shape: f32[4,128], index: 3, kind: output, shape index: {}]
  %s4 = sld [smem:[#allocation0]]
  $region26: #{tpu_custom_call.1} parent=0
    _
  %s6 = ssub.s32 1, %s4
  %s7 = scalar_select 0, %s6, %s4
  $region1: #{tpu_custom_call.1} parent=0
    #allocation2 [shape = 'u8[2048]{0}', space=vmem, size = 0x800, scoped, tag = 'input window, operand 0, single buffered']
    #allocation3 [shape = 's32[1]{0}', space=sflag, size = 0x4, scoped, tag = 'scoped memory for tpu_custom_call.1']
    #allocation4 [shape = 's32[1]{0}', space=sflag, size = 0x4, scoped, tag = 'scoped memory for tpu_custom_call.1']
    #allocation5 [shape = 'u8[2048]{0}', space=vmem, size = 0x800, scoped, tag = 'output window, operand 0, single buffered']
    %8 = vsyncpa [#allocation3], 0
    %9 = vsyncpa [#allocation4], 0
    // Predicated region
    $region2: #{tpu_custom_call.1} parent=1 // pred_check
      _
    $region3: #{tpu_custom_call.1} parent=1 // pred_check_branch
      %11 = sbr.rel (0) target = $region5
    $region4: #{tpu_custom_call.1} parent=1 // pred_region
      %s13 = ssub.s32 64, 64
      %14 = vsyncadd [#allocation3], %s13
      %s16 = sshll.u32 [#allocation2], 4
      %s17 = int_to_ptr.vmem [resolvable:$true] %s16
      %19 = dma.hbm_to_vmem [thread:$0]  %s0, 64, %s17, [#allocation3]
    $region5: #{tpu_custom_call.1} parent=1 // pred_fallthru
      _
    // Predicated region
    $region6: #{tpu_custom_call.1} parent=1 // pred_check
      _
    $region7: #{tpu_custom_call.1} parent=1 // pred_check_branch
      %21 = sbr.rel (0) target = $region9
    $region8: #{tpu_custom_call.1} parent=1 // pred_region
      _
    $region9: #{tpu_custom_call.1} parent=1 // pred_fallthru
      _
    // Predicated region
    $region10: #{tpu_custom_call.1} parent=1 // pred_check
      _
    $region11: #{tpu_custom_call.1} parent=1 // pred_check_branch
      %23 = sbr.rel (0) target = $region13
    $region12: #{tpu_custom_call.1} parent=1 // pred_region
      _
    $region13: #{tpu_custom_call.1} parent=1 // pred_fallthru
      _
    // Predicated region
    $region14: #{tpu_custom_call.1} parent=1 // pred_check
      _
    $region15: #{tpu_custom_call.1} parent=1 // pred_check_branch
      %25 = sbr.rel (0) target = $region17
    $region16: #{tpu_custom_call.1} parent=1 // pred_region
      %26 = dma.done [#allocation3], 64
    $region17: #{tpu_custom_call.1} parent=1 // pred_fallthru
      _
    %v27 = vld [vmem:[#allocation2] sm:$0xf]
    %vm28 = vcmask 257024
    %v29 = vsel %vm28, %v27, 0.0
    %30 = vadd.xlane.f32.xlu0 %v29
    %v31 = vpop.xlane.xlu0 %30
    %v32 = vrcp.pop 32.0
    %v33 = vmul.f32 %v31, %v32
    %v34 = vsub.f32 %v27, %v33
    %v35 = vmul.f32 %v34, %v34
    %v36 = vsel %vm28, %v35, 0.0
    %37 = vadd.xlane.f32.xlu0 %v36
    %v38 = vpop.xlane.xlu0 %37
    %v39 = vmul.f32 %v38, %v32
    %v40 = vadd.f32 %v39, 1e-05
    %v41 = vrsqrt.pop %v40
    %v42 = vmul.f32 %v34, %v41
    %44 = vrot.lane.b32.xlu0 %v27, 96
    %v45 = vpop.permute.xlu0 %44
    %v47 = vsel %vm28, %v45, 0.0
    %48 = vadd.xlane.f32.xlu0 %v47
    %v49 = vpop.xlane.xlu0 %48
    %v50 = vmul.f32 %v49, %v32
    %v51 = vsub.f32 %v27, %v50
    %v52 = vmul.f32 %v51, %v51
    %54 = vrot.lane.b32.xlu0 %v52, 96
    %v55 = vpop.permute.xlu0 %54
    %v57 = vsel %vm28, %v55, 0.0
    %58 = vadd.xlane.f32.xlu0 %v57
    %v59 = vpop.xlane.xlu0 %58
    %v60 = vmul.f32 %v59, %v32
    %v61 = vadd.f32 %v60, 1e-05
    %v62 = vrsqrt.pop %v61
    %v63 = vmul.f32 %v51, %v62
    %64 = vrot.lane.b32.xlu0 %v27, 64
    %v65 = vpop.permute.xlu0 %64
    %v67 = vsel %vm28, %v65, 0.0
    %68 = vadd.xlane.f32.xlu0 %v67
    %v69 = vpop.xlane.xlu0 %68
    %v70 = vmul.f32 %v69, %v32
    %v71 = vsub.f32 %v27, %v70
    %v72 = vmul.f32 %v71, %v71
    %74 = vrot.lane.b32.xlu0 %v72, 64
    %v75 = vpop.permute.xlu0 %74
    %v77 = vsel %vm28, %v75, 0.0
    %78 = vadd.xlane.f32.xlu0 %v77
    %v79 = vpop.xlane.xlu0 %78
    %v80 = vmul.f32 %v79, %v32
    %v81 = vadd.f32 %v80, 1e-05
    %v82 = vrsqrt.pop %v81
    %v83 = vmul.f32 %v71, %v82
    %84 = vrot.lane.b32.xlu0 %v27, 32
    %v85 = vpop.permute.xlu0 %84
    %v87 = vsel %vm28, %v85, 0.0
    %88 = vadd.xlane.f32.xlu0 %v87
    %v89 = vpop.xlane.xlu0 %88
    %v90 = vmul.f32 %v89, %v32
    %v91 = vsub.f32 %v27, %v90
    %v92 = vmul.f32 %v91, %v91
    %94 = vrot.lane.b32.xlu0 %v92, 32
    %v95 = vpop.permute.xlu0 %94
    %v97 = vsel %vm28, %v95, 0.0
    %98 = vadd.xlane.f32.xlu0 %v97
    %v99 = vpop.xlane.xlu0 %98
    %v100 = vmul.f32 %v99, %v32
    %v101 = vadd.f32 %v100, 1e-05
    %v102 = vrsqrt.pop %v101
    %v103 = vmul.f32 %v91, %v102
    %vm104 = vcmask 261120
    %v105 = vsel %vm104, %v42, %v63
    %vm106 = vcmask 523264
    %v107 = vsel %vm106, %v105, %v83
    %vm108 = vcmask 785408
    %v109 = vsel %vm108, %v107, %v103
    %v110 = vld [vmem:[%s1] sm:$0x1]
    %v112 = vlaneseq
    %v113 = vshrl.u32 %v112, 7
    %v114 = vsub.s32 0, %v113
    %v115 = vrot.slane %v110, %v114
    %v117 = vmul.f32 %v109, %v115
    %v118 = vld [vmem:[%s2] sm:$0x1]
    %v120 = vlaneseq
    %v121 = vshrl.u32 %v120, 7
    %v122 = vsub.s32 0, %v121
    %v123 = vrot.slane %v118, %v122
    %v125 = vadd.f32 %v117, %v123
    %126 = vst [vmem:[#allocation5] sm:$0xf] %v125
    // Predicated region
    $region18: #{tpu_custom_call.1} parent=1 // pred_check
      _
    $region19: #{tpu_custom_call.1} parent=1 // pred_check_branch
      %128 = sbr.rel (0) target = $region21
    $region20: #{tpu_custom_call.1} parent=1 // pred_region
      %s130 = ssub.s32 64, 64
      %131 = vsyncadd [#allocation4], %s130
      %s133 = sshll.u32 [#allocation5], 4
      %s134 = int_to_ptr.vmem [resolvable:$true] %s133
      %136 = dma.vmem_to_hbm [thread:$0]  %s134, 64, %s3, [#allocation4]
    $region21: #{tpu_custom_call.1} parent=1 // pred_fallthru
      _
    // Predicated region
    $region22: #{tpu_custom_call.1} parent=1 // pred_check
      _
    $region23: #{tpu_custom_call.1} parent=1 // pred_check_branch
      %138 = sbr.rel (0) target = $region25
    $region24: #{tpu_custom_call.1} parent=1 // pred_region
      %139 = dma.done [#allocation4], 64
    $region25: #{tpu_custom_call.1} parent=1 // pred_fallthru
      _
    %140 = vsyncpa [#allocation3], 1
    %141 = vsyncpa [#allocation4], 1

</llo_original>
